<compile_context>
chip_gen: v7x
topology: tpu7x:2x2x1
jax: 0.10.0
libtpu: 0.0.40
codegen_flags: <defaults>
</compile_context>

<pallas_src>
import functools

import jax
import jax.numpy as jnp
from jax.experimental import pallas as pl
from jax.experimental.pallas import tpu as pltpu


def _round_up(x, m):
    return (x + m - 1) // m * m


def _dice_kernel(pred_ref, targ_ref, out_ref, inter_acc, sum_acc, *,
                 smooth, n_rows, n_cols, tile_r, tile_s, mask_cols, mask_rows):
    r = pl.program_id(0)
    s = pl.program_id(1)

    @pl.when(s == 0)
    def _init():
        inter_acc[...] = jnp.zeros_like(inter_acc)
        sum_acc[...] = jnp.zeros_like(sum_acc)

    num_chunks = tile_s // 128
    if mask_cols:
        lane = jax.lax.broadcasted_iota(jnp.int32, (tile_r, 128), 1)
        col0 = s * tile_s

    # Stream the tile in 128-lane chunks loaded straight from the refs:
    # keeps temporaries in vregs (no big VMEM intermediates) and keeps all
    # per-tile reduction work on the VPU (no XLU reduce in the hot loop).
    inter_part = jnp.zeros((tile_r, 128), jnp.float32)
    sum_part = jnp.zeros((tile_r, 128), jnp.float32)
    for k in range(num_chunks):  # static unroll (tile_s <= 4096 -> <= 32 iters)
        p = jax.nn.sigmoid(
            pred_ref[:, k * 128:(k + 1) * 128].astype(jnp.float32))
        t = targ_ref[:, k * 128:(k + 1) * 128].astype(jnp.float32)
        if mask_cols:
            valid = (col0 + (k * 128) + lane) < n_cols
            p = jnp.where(valid, p, 0.0)
            t = jnp.where(valid, t, 0.0)
        inter_part = inter_part + p * t
        sum_part = sum_part + (p + t)
    inter_acc[...] += inter_part
    sum_acc[...] += sum_part

    @pl.when(s == pl.num_programs(1) - 1)
    def _finalize():
        inter = jnp.sum(inter_acc[...], axis=1, keepdims=True)   # (tile_r, 1)
        denom = jnp.sum(sum_acc[...], axis=1, keepdims=True)     # sum(p) + sum(t)
        loss = 1.0 - (2.0 * inter + smooth) / (denom + smooth)
        if mask_rows:
            row = r * tile_r + jax.lax.broadcasted_iota(
                jnp.int32, (tile_r, 1), 0)
            loss = jnp.where(row < n_rows, loss, 0.0)
        out_ref[...] = loss.astype(out_ref.dtype)


def dice_loss(predictions, targets, smooth=1.0):
    """Pallas implementation of DiceLoss.forward (predictions: logits NCHW)."""
    B, C, H, W = predictions.shape
    R, S = B * C, H * W

    # Flatten to (rows, spatial); native dtypes — no upcast, no padding copy.
    pred2 = predictions.reshape(R, S)
    targ2 = targets.reshape(R, S)

    # ---- Tile sizing: bound rows (accumulator / vreg pressure), size the
    # spatial tile for ~2 MiB of HBM traffic per grid step (good pipelining,
    # fits comfortably in scoped VMEM on v5e/v6e/v7x). ----
    tile_r = R if R <= 64 else 64            # ==R (full dim) or multiple of 8
    bytes_per_col = tile_r * (pred2.dtype.itemsize + targ2.dtype.itemsize)
    tile_s = (2 << 20) // max(bytes_per_col, 1)
    tile_s = max(128, min(4096, (tile_s // 128) * 128))   # multiple of 128
    tile_s = min(tile_s, _round_up(S, 128))

    grid = (pl.cdiv(R, tile_r), pl.cdiv(S, tile_s))

    # ---- Shape-derived scoped-VMEM limit (don't request all of v7x's 64 MiB):
    # double-buffered input blocks + accumulators + output + headroom. ----
    vmem_bytes = (
        2 * tile_r * tile_s * (pred2.dtype.itemsize + targ2.dtype.itemsize)
        + 2 * tile_r * 128 * 4        # (tile_r, 128) accumulators
        + 2 * tile_r * 4              # per-row loss output (double-buffered)
        + (2 << 20))                  # compiler-internal scratch headroom
    vmem_limit = int(min(max(vmem_bytes, 4 << 20), 48 << 20))

    kernel = functools.partial(
        _dice_kernel, smooth=float(smooth), n_rows=R, n_cols=S,
        tile_r=tile_r, tile_s=tile_s,
        mask_cols=(S % tile_s != 0), mask_rows=(R % tile_r != 0))

    per_row = pl.pallas_call(
        kernel,
        out_shape=jax.ShapeDtypeStruct((R, 1), jnp.float32),
        grid_spec=pltpu.PrefetchScalarGridSpec(
            num_scalar_prefetch=0,
            grid=grid,
            in_specs=[pl.BlockSpec((tile_r, tile_s), lambda r, s: (r, s)),
                      pl.BlockSpec((tile_r, tile_s), lambda r, s: (r, s))],
            out_specs=pl.BlockSpec((tile_r, 1), lambda r, s: (r, 0)),
            scratch_shapes=[pltpu.VMEM((tile_r, 128), jnp.float32),
                            pltpu.VMEM((tile_r, 128), jnp.float32)]),
        compiler_params=pltpu.CompilerParams(
            dimension_semantics=("parallel", "arbitrary"),
            vmem_limit_bytes=vmem_limit),
    )(pred2, targ2)

    # Final mean over B*C per-channel dice losses (tiny: R scalars).
    return jnp.mean(per_row)


def _dice_loss_ref(predictions, targets, smooth=1.0):
    p = jax.nn.sigmoid(predictions)
    inter = (p * targets).sum(axis=2).sum(axis=2)
    loss = 1.0 - (2.0 * inter + smooth) / (
        p.sum(axis=2).sum(axis=2) + targets.sum(axis=2).sum(axis=2) + smooth
    )
    return loss.mean()


if __name__ == "__main__":
    key = jax.random.PRNGKey(0)
    k1, k2 = jax.random.split(key)

    B, C, H, W = 2, 4, 16, 16
    predictions = jax.random.normal(k1, (B, C, H, W), dtype=jnp.float32)
    targets = (jax.random.uniform(k2, (B, C, H, W)) > 0.5).astype(jnp.float32)

    out = dice_loss(predictions, targets, smooth=1.0)
    out = jax.block_until_ready(out)

    ref = _dice_loss_ref(predictions, targets, smooth=1.0)
    assert jnp.allclose(out, ref, atol=1e-5, rtol=1e-5), (out, ref)

    print("KERNEL_OK")
</pallas_src>

<mosaic_0001>
module attributes {stable_mosaic.version = 11 : i64} {
  func.func @_dice_kernel(%arg0: i32, %arg1: i32, %arg2: memref<8x256xf32, #tpu.memory_space<vmem>>, %arg3: memref<8x256xf32, #tpu.memory_space<vmem>>, %arg4: memref<8x1xf32, #tpu.memory_space<vmem>>, %arg5: memref<8x128xf32, #tpu.memory_space<vmem>>, %arg6: memref<8x128xf32, #tpu.memory_space<vmem>>) attributes {dimension_semantics = [#tpu.dimension_semantics<parallel>, #tpu.dimension_semantics<arbitrary>], iteration_bounds = array<i64: 1, 1>, scalar_prefetch = 0 : i64, scratch_operands = 2 : i64, tpu.core_type = #tpu.core_type<tc>, window_params = [{transform_indices = @transform_0, window_bounds = array<i64: 8, 256>}, {transform_indices = @transform_1, window_bounds = array<i64: 8, 256>}, {transform_indices = @transform_2, window_bounds = array<i64: 8, 1>}]} {
    %c0_i32 = arith.constant 0 : i32
    %0 = arith.cmpi eq, %arg1, %c0_i32 : i32
    %1 = arith.extui %0 : i1 to i32
    %c0_i32_0 = arith.constant 0 : i32
    %2 = arith.cmpi ne, %1, %c0_i32_0 : i32
    scf.if %2 {
      %cst_20 = arith.constant 0.000000e+00 : f32
      %36 = vector.broadcast %cst_20 : f32 to vector<8x128xf32>
      %c0_21 = arith.constant 0 : index
      %c0_22 = arith.constant 0 : index
      %37 = vector.load %arg5[%c0_21, %c0_22] : memref<8x128xf32, #tpu.memory_space<vmem>>, vector<8x128xf32>
      tpu.vector_store %arg5[%c0_21, %c0_22], %36 {strides = array<i32>} : memref<8x128xf32, #tpu.memory_space<vmem>>, vector<8x128xf32>,
      %cst_23 = arith.constant 0.000000e+00 : f32
      %38 = vector.broadcast %cst_23 : f32 to vector<8x128xf32>
      %c0_24 = arith.constant 0 : index
      %c0_25 = arith.constant 0 : index
      %39 = vector.load %arg6[%c0_24, %c0_25] : memref<8x128xf32, #tpu.memory_space<vmem>>, vector<8x128xf32>
      tpu.vector_store %arg6[%c0_24, %c0_25], %38 {strides = array<i32>} : memref<8x128xf32, #tpu.memory_space<vmem>>, vector<8x128xf32>,
    } else {
    }
    %cst = arith.constant 0.000000e+00 : f32
    %3 = vector.broadcast %cst : f32 to vector<8x128xf32>
    %cst_1 = arith.constant 0.000000e+00 : f32
    %4 = vector.broadcast %cst_1 : f32 to vector<8x128xf32>
    %c0 = arith.constant 0 : index
    %c0_2 = arith.constant 0 : index
    %5 = vector.load %arg2[%c0, %c0_2] : memref<8x256xf32, #tpu.memory_space<vmem>>, vector<8x128xf32>
    %6 = arith.negf %5 : vector<8x128xf32>
    %7 = math.exp %6 : vector<8x128xf32>
    %cst_3 = arith.constant 1.000000e+00 : f32
    %8 = vector.broadcast %cst_3 : f32 to vector<8x128xf32>
    %9 = arith.addf %8, %7 : vector<8x128xf32>
    %10 = arith.divf %8, %9 : vector<8x128xf32>
    %c0_4 = arith.constant 0 : index
    %c0_5 = arith.constant 0 : index
    %11 = vector.load %arg3[%c0_4, %c0_5] : memref<8x256xf32, #tpu.memory_space<vmem>>, vector<8x128xf32>
    %12 = arith.mulf %10, %11 : vector<8x128xf32>
    %13 = arith.addf %3, %12 : vector<8x128xf32>
    %14 = arith.addf %10, %11 : vector<8x128xf32>
    %15 = arith.addf %4, %14 : vector<8x128xf32>
    %c0_6 = arith.constant 0 : index
    %c128 = arith.constant 128 : index
    %16 = vector.load %arg2[%c0_6, %c128] : memref<8x256xf32, #tpu.memory_space<vmem>>, vector<8x128xf32>
    %17 = arith.negf %16 : vector<8x128xf32>
    %18 = math.exp %17 : vector<8x128xf32>
    %cst_7 = arith.constant 1.000000e+00 : f32
    %19 = vector.broadcast %cst_7 : f32 to vector<8x128xf32>
    %20 = arith.addf %19, %18 : vector<8x128xf32>
    %21 = arith.divf %19, %20 : vector<8x128xf32>
    %c0_8 = arith.constant 0 : index
    %c128_9 = arith.constant 128 : index
    %22 = vector.load %arg3[%c0_8, %c128_9] : memref<8x256xf32, #tpu.memory_space<vmem>>, vector<8x128xf32>
    %23 = arith.mulf %21, %22 : vector<8x128xf32>
    %24 = arith.addf %13, %23 : vector<8x128xf32>
    %25 = arith.addf %21, %22 : vector<8x128xf32>
    %26 = arith.addf %15, %25 : vector<8x128xf32>
    %c0_10 = arith.constant 0 : index
    %c0_11 = arith.constant 0 : index
    %27 = vector.load %arg5[%c0_10, %c0_11] : memref<8x128xf32, #tpu.memory_space<vmem>>, vector<8x128xf32>
    %28 = arith.addf %27, %24 : vector<8x128xf32>
    %c0_12 = arith.constant 0 : index
    %c0_13 = arith.constant 0 : index
    %29 = vector.load %arg5[%c0_12, %c0_13] : memref<8x128xf32, #tpu.memory_space<vmem>>, vector<8x128xf32>
    tpu.vector_store %arg5[%c0_12, %c0_13], %28 {strides = array<i32>} : memref<8x128xf32, #tpu.memory_space<vmem>>, vector<8x128xf32>,
    %c0_14 = arith.constant 0 : index
    %c0_15 = arith.constant 0 : index
    %30 = vector.load %arg6[%c0_14, %c0_15] : memref<8x128xf32, #tpu.memory_space<vmem>>, vector<8x128xf32>
    %31 = arith.addf %30, %26 : vector<8x128xf32>
    %c0_16 = arith.constant 0 : index
    %c0_17 = arith.constant 0 : index
    %32 = vector.load %arg6[%c0_16, %c0_17] : memref<8x128xf32, #tpu.memory_space<vmem>>, vector<8x128xf32>
    tpu.vector_store %arg6[%c0_16, %c0_17], %31 {strides = array<i32>} : memref<8x128xf32, #tpu.memory_space<vmem>>, vector<8x128xf32>,
    %c0_i32_18 = arith.constant 0 : i32
    %33 = arith.cmpi eq, %arg1, %c0_i32_18 : i32
    %34 = arith.extui %33 : i1 to i32
    %c0_i32_19 = arith.constant 0 : i32
    %35 = arith.cmpi ne, %34, %c0_i32_19 : i32
    scf.if %35 {
      %c0_20 = arith.constant 0 : index
      %c0_21 = arith.constant 0 : index
      %36 = vector.load %arg5[%c0_20, %c0_21] : memref<8x128xf32, #tpu.memory_space<vmem>>, vector<8x128xf32>
      %cst_22 = arith.constant dense<0.000000e+00> : vector<8xf32>
      %37 = vector.multi_reduction <add>, %36, %cst_22 [1] : vector<8x128xf32> to vector<8xf32>
      %38 = vector.shape_cast %37 : vector<8xf32> to vector<8x1xf32>
      %c0_23 = arith.constant 0 : index
      %c0_24 = arith.constant 0 : index
      %39 = vector.load %arg6[%c0_23, %c0_24] : memref<8x128xf32, #tpu.memory_space<vmem>>, vector<8x128xf32>
      %cst_25 = arith.constant dense<0.000000e+00> : vector<8xf32>
      %40 = vector.multi_reduction <add>, %39, %cst_25 [1] : vector<8x128xf32> to vector<8xf32>
      %41 = vector.shape_cast %40 : vector<8xf32> to vector<8x1xf32>
      %cst_26 = arith.constant 2.000000e+00 : f32
      %42 = vector.broadcast %cst_26 : f32 to vector<8x1xf32>
      %43 = arith.mulf %42, %38 : vector<8x1xf32>
      %cst_27 = arith.constant 1.000000e+00 : f32
      %44 = vector.broadcast %cst_27 : f32 to vector<8x1xf32>
      %45 = arith.addf %43, %44 : vector<8x1xf32>
      %cst_28 = arith.constant 1.000000e+00 : f32
      %46 = vector.broadcast %cst_28 : f32 to vector<8x1xf32>
      %47 = arith.addf %41, %46 : vector<8x1xf32>
      %48 = arith.divf %45, %47 : vector<8x1xf32>
      %cst_29 = arith.constant 1.000000e+00 : f32
      %49 = vector.broadcast %cst_29 : f32 to vector<8x1xf32>
      %50 = arith.subf %49, %48 : vector<8x1xf32>
      %c0_30 = arith.constant 0 : index
      %c0_31 = arith.constant 0 : index
      %51 = vector.load %arg4[%c0_30, %c0_31] : memref<8x1xf32, #tpu.memory_space<vmem>>, vector<8x1xf32>
      tpu.vector_store %arg4[%c0_30, %c0_31], %50 {strides = array<i32>} : memref<8x1xf32, #tpu.memory_space<vmem>>, vector<8x1xf32>,
    } else {
    }
    return
  }
  func.func @transform_0(%arg0: i32, %arg1: i32) -> (i32, i32) {
    %c0_i32 = arith.constant 0 : i32
    return %arg0, %arg1 : i32, i32
  }
  func.func @transform_1(%arg0: i32, %arg1: i32) -> (i32, i32) {
    %c0_i32 = arith.constant 0 : i32
    return %arg0, %arg1 : i32, i32
  }
  func.func @transform_2(%arg0: i32, %arg1: i32) -> (i32, i32) {
    %c0_i32 = arith.constant 0 : i32
    %c0_i32_0 = arith.constant 0 : i32
    return %arg0, %c0_i32 : i32, i32
  }
}

</mosaic_0001>

<llo_original>
// kernel: tpu_custom_call.1
$region0: #{tpu_custom_call.1}
  #allocation0 [shape = 'u32[]', space=smem, size = 0x4, offset = 0x4, fixed_abs, tag = 'smem constant byte address 0x4 - core index']
  #allocation1 [shape = 'u32[144,128]{1,0:T(1,128)}', space=vmem, size = 0x12000, scoped, tag = 'internal scratch']
  #allocation2 [shape = 'f32[8,128]{1,0:T(8,128)}', space=vmem, size = 0x1000, scoped, tag = 'scratch operand']
  #allocation3 [shape = 'f32[8,128]{1,0:T(8,128)}', space=vmem, size = 0x1000, scoped, tag = 'scratch operand']
  %s0 = inlined_call_operand.hbm [shape: f32[8,256], index: 0, kind: input, shape index: {}]
  %s1 = inlined_call_operand.hbm [shape: f32[8,256], index: 1, kind: input, shape index: {}]
  %s2 = inlined_call_operand.vmem [shape: f32[8,1], index: 2, kind: output, shape index: {}]
  %s3 = sld [smem:[#allocation0]]
  $region34: #{tpu_custom_call.1} parent=0
    _
  %s5 = ssub.s32 1, %s3
  %s6 = scalar_select 0, %s5, %s3
  $region1: #{tpu_custom_call.1} parent=0
    #allocation4 [shape = 'u8[8192]{0}', space=vmem, size = 0x2000, scoped, tag = 'input window, operand 0, single buffered']
    #allocation5 [shape = 's32[1]{0}', space=sflag, size = 0x4, scoped, tag = 'scoped memory for tpu_custom_call.1']
    #allocation6 [shape = 'u8[8192]{0}', space=vmem, size = 0x2000, scoped, tag = 'input window, operand 1, single buffered']
    #allocation7 [shape = 's32[1]{0}', space=sflag, size = 0x4, scoped, tag = 'scoped memory for tpu_custom_call.1']
    %7 = vsyncpa [#allocation5], 0
    %8 = vsyncpa [#allocation7], 0
    // Predicated region
    $region2: #{tpu_custom_call.1} parent=1 // pred_check
      _
    $region3: #{tpu_custom_call.1} parent=1 // pred_check_branch
      %10 = sbr.rel (0) target = $region5
    $region4: #{tpu_custom_call.1} parent=1 // pred_region
      %s12 = ssub.s32 256, 256
      %13 = vsyncadd [#allocation5], %s12
      %s15 = sshll.u32 [#allocation4], 4
      %s16 = int_to_ptr.vmem [resolvable:$true] %s15
      %18 = dma.hbm_to_vmem [thread:$0]  %s0, 256, %s16, [#allocation5]
    $region5: #{tpu_custom_call.1} parent=1 // pred_fallthru
      _
    // Predicated region
    $region6: #{tpu_custom_call.1} parent=1 // pred_check
      _
    $region7: #{tpu_custom_call.1} parent=1 // pred_check_branch
      %20 = sbr.rel (0) target = $region9
    $region8: #{tpu_custom_call.1} parent=1 // pred_region
      %s22 = ssub.s32 256, 256
      %23 = vsyncadd [#allocation7], %s22
      %s25 = sshll.u32 [#allocation6], 4
      %s26 = int_to_ptr.vmem [resolvable:$true] %s25
      %28 = dma.hbm_to_vmem [thread:$0]  %s1, 256, %s26, [#allocation7]
    $region9: #{tpu_custom_call.1} parent=1 // pred_fallthru
      _
    // Predicated region
    $region10: #{tpu_custom_call.1} parent=1 // pred_check
      _
    $region11: #{tpu_custom_call.1} parent=1 // pred_check_branch
      %30 = sbr.rel (0) target = $region13
    $region12: #{tpu_custom_call.1} parent=1 // pred_region
      %31 = dma.done [#allocation5], 256
    $region13: #{tpu_custom_call.1} parent=1 // pred_fallthru
      _
    // Predicated region
    $region14: #{tpu_custom_call.1} parent=1 // pred_check
      _
    $region15: #{tpu_custom_call.1} parent=1 // pred_check_branch
      %33 = sbr.rel (0) target = $region17
    $region16: #{tpu_custom_call.1} parent=1 // pred_region
      %34 = dma.done [#allocation7], 256
    $region17: #{tpu_custom_call.1} parent=1 // pred_fallthru
      _
    %p35 = scmp.eq.s32.totalorder 0, 0
    // Predicated region
    $region18: #{tpu_custom_call.1} parent=1 // pred_check
      %p36 = pneg %p35
    $region19: #{tpu_custom_call.1} parent=1 // pred_check_branch
      %38 = sbr.rel (%p36) target = $region21
    $region20: #{tpu_custom_call.1} parent=1 // pred_region
      %39 = vst [vmem:[#allocation2] sm:$0xff] 0.0
      %40 = vst [vmem:[#allocation3] sm:$0xff] 0.0
    $region21: #{tpu_custom_call.1} parent=1 // pred_fallthru
      _
    %v41 = vld [vmem:[#allocation4] sm:$0xff]
    %v42 = vxor.u32 %v41, 2147483648
    %v43 = vmul.f32 %v42, 1.442695
    %v44 = vpow.pop %v43
    %v45 = vadd.f32 %v44, 1.0
    %v46 = vrcp.pop %v45
    %v47 = vmul.f32 1.0, %v46
    %v48 = vld [vmem:[#allocation6] sm:$0xff]
    %v49 = vmul.f32 %v47, %v48
    %v50 = vadd.f32 %v49, 0.0
    %v51 = vadd.f32 %v47, %v48
    %v52 = vadd.f32 %v51, 0.0
    %v53 = vld [vmem:[#allocation4 + $0x8] sm:$0xff]
    %v54 = vxor.u32 %v53, 2147483648
    %v55 = vmul.f32 %v54, 1.442695
    %v56 = vpow.pop %v55
    %v57 = vadd.f32 %v56, 1.0
    %v58 = vrcp.pop %v57
    %v59 = vmul.f32 1.0, %v58
    %v60 = vld [vmem:[#allocation6 + $0x8] sm:$0xff]
    %v61 = vmul.f32 %v59, %v60
    %v62 = vadd.f32 %v50, %v61
    %v63 = vadd.f32 %v59, %v60
    %v64 = vadd.f32 %v52, %v63
    %v65 = vld [vmem:[#allocation2] sm:$0xff]
    %v66 = vadd.f32 %v65, %v62
    %67 = vst [vmem:[#allocation2] sm:$0xff] %v66
    %v68 = vld [vmem:[#allocation3] sm:$0xff]
    %v69 = vadd.f32 %v68, %v64
    %70 = vst [vmem:[#allocation3] sm:$0xff] %v69
    // Predicated region
    $region22: #{tpu_custom_call.1} parent=1 // pred_check
      %p71 = pneg %p35
    $region23: #{tpu_custom_call.1} parent=1 // pred_check_branch
      %73 = sbr.rel (%p71) target = $region25
    $region24: #{tpu_custom_call.1} parent=1 // pred_region
      %v74 = vld [vmem:[#allocation2] sm:$0xff]
      %75 = vadd.xlane.f32.xlu0 %v74
      %v76 = vpop.xlane.xlu0 %75
      %v77 = vld [vmem:[#allocation3] sm:$0xff]
      %78 = vadd.xlane.f32.xlu0 %v77
      %v79 = vpop.xlane.xlu0 %78
      %v80 = vmul.f32 %v76, 2.0
      %v81 = vadd.f32 %v80, 1.0
      %v82 = vadd.f32 %v79, 1.0
      %v83 = vrcp.pop %v82
      %v84 = vmul.f32 %v81, %v83
      %v85 = vsub.f32 1.0, %v84
      %vm86 = vcmask 7168
      %87 = vst.msk [vmem:[%s2] sm:$0xff] %vm86, %v85
    $region25: #{tpu_custom_call.1} parent=1 // pred_fallthru
      _
    // Predicated region
    $region26: #{tpu_custom_call.1} parent=1 // pred_check
      _
    $region27: #{tpu_custom_call.1} parent=1 // pred_check_branch
      %89 = sbr.rel (0) target = $region29
    $region28: #{tpu_custom_call.1} parent=1 // pred_region
      _
    $region29: #{tpu_custom_call.1} parent=1 // pred_fallthru
      _
    // Predicated region
    $region30: #{tpu_custom_call.1} parent=1 // pred_check
      _
    $region31: #{tpu_custom_call.1} parent=1 // pred_check_branch
      %91 = sbr.rel (0) target = $region33
    $region32: #{tpu_custom_call.1} parent=1 // pred_region
      _
    $region33: #{tpu_custom_call.1} parent=1 // pred_fallthru
      _
    %92 = vsyncpa [#allocation5], 1
    %93 = vsyncpa [#allocation7], 1

</llo_original>
